<compile_context>
chip_gen: v5e
topology: v5e:2x2
jax: 0.10.0
libtpu: 0.0.40
codegen_flags: <defaults>
</compile_context>

<pallas_src>
import jax
import jax.numpy as jnp
from jax.experimental import pallas as pl
from jax.experimental.pallas import tpu as pltpu

_LANE = 128                    # lane width: last dims padded to multiples of this
_SUBLANE = 8                   # f32 sublane granularity (bf16 packs 2x -> 16 rows)
_MXU_M = 256                   # v6e/v7x MXU pass width along M
_DEFAULT_VMEM_BUDGET = 48 * 1024 * 1024   # stay under v7x's 64 MiB physical


def _round_up(n, m):
    return ((n + m - 1) // m) * m


def _pad2d(a, rows, cols, dtype):
    """Zero-pad a 2-D array to (rows, cols) in `dtype`; no-op when already aligned."""
    a = jnp.asarray(a, dtype)
    if a.shape == (rows, cols):
        return a
    return jnp.zeros((rows, cols), dtype).at[:a.shape[0], :a.shape[1]].set(a)


# ----------------------------------------------------------------------------
# Kernels
# ----------------------------------------------------------------------------
def _mlp_kernel_resident(x_ref, w1_ref, b1_ref, w2_ref, b2_ref, out_ref):
    """Fused 2-layer MLP, weights fully VMEM-resident.

    x_ref  : (TB, Ip)  compute dtype (f32 or bf16)
    w1_ref : (Ip, Hp)  pre-transposed -> MXU consumes directly
    b1_ref : (1,  Hp)  f32
    w2_ref : (Hp, Op)  pre-transposed
    b2_ref : (1,  Op)  f32
    out_ref: (TB, Op)  out dtype
    """
    z1 = jnp.dot(x_ref[...], w1_ref[...], preferred_element_type=jnp.float32)
    a1 = jnp.maximum(z1 + b1_ref[...], 0.0)
    z2 = jnp.dot(a1.astype(w2_ref.dtype), w2_ref[...],
                 preferred_element_type=jnp.float32)
    out_ref[...] = jax.nn.sigmoid(z2 + b2_ref[...]).astype(out_ref.dtype)


def _mlp_kernel_htiled(x_ref, w1_ref, b1_ref, w2_ref, b2_ref, out_ref, acc_ref):
    """Fallback: hidden dim tiled across a reduction grid axis (large weights).

    Grid = (batch_tiles, hidden_tiles); hidden axis is "arbitrary" (reduction).
    w1_ref : (Ip, TH), b1_ref : (1, TH), w2_ref : (TH, Op).
    acc_ref: (TB, Op) f32 scratch accumulator, persists across the h axis.
    """
    h = pl.program_id(1)

    @pl.when(h == 0)
    def _():
        acc_ref[...] = jnp.zeros_like(acc_ref)

    z1 = jnp.dot(x_ref[...], w1_ref[...], preferred_element_type=jnp.float32)
    a1 = jnp.maximum(z1 + b1_ref[...], 0.0)
    acc_ref[...] += jnp.dot(a1.astype(w2_ref.dtype), w2_ref[...],
                            preferred_element_type=jnp.float32)

    @pl.when(h == pl.num_programs(1) - 1)
    def _():
        out_ref[...] = jax.nn.sigmoid(acc_ref[...] + b2_ref[...]).astype(out_ref.dtype)


# ----------------------------------------------------------------------------
# Wrapper
# ----------------------------------------------------------------------------
def prepare_params(w1, b1, w2, b2, *, compute_dtype=jnp.bfloat16):
    """Transpose + lane-pad PyTorch-layout params once (hoist out of the hot path).

    w1: (H, I), b1: (H,), w2: (O, H), b2: (O,)  ->  padded (I,H)/(H,O) layouts.
    """
    H, I = w1.shape
    O = w2.shape[0]
    Ip, Hp, Op = (_round_up(d, _LANE) for d in (I, H, O))
    cdt = jnp.dtype(compute_dtype)
    return dict(
        I=I, H=H, O=O, Ip=Ip, Hp=Hp, Op=Op, compute_dtype=cdt,
        w1=_pad2d(jnp.asarray(w1, cdt).T, Ip, Hp, cdt),           # (Ip, Hp)
        w2=_pad2d(jnp.asarray(w2, cdt).T, Hp, Op, cdt),           # (Hp, Op)
        b1=_pad2d(jnp.asarray(b1, jnp.float32)[None, :], 1, Hp, jnp.float32),
        b2=_pad2d(jnp.asarray(b2, jnp.float32)[None, :], 1, Op, jnp.float32),
    )


def mlp_forward(x, params, *, batch_tile=256, hidden_tile=None,
                out_dtype=jnp.float32,
                vmem_budget_bytes=_DEFAULT_VMEM_BUDGET):
    """Forward pass with pre-prepared params. x: (B, I). Returns (B, O) out_dtype."""
    B, I = x.shape
    assert I == params["I"], f"input dim mismatch: {I} vs {params['I']}"
    cdt = params["compute_dtype"]
    itemsize = cdt.itemsize
    out_dtype = jnp.dtype(out_dtype)
    o_item = out_dtype.itemsize
    I_, H, O = params["I"], params["H"], params["O"]
    Ip, Hp, Op = params["Ip"], params["Hp"], params["Op"]
    w1_p, w2_p, b1_p, b2_p = params["w1"], params["w2"], params["b1"], params["b2"]

    # ---- batch tile selection ---------------------------------------------
    # Row granularity covers the most-packed dtype touching a (TB, *) tile.
    row_gran = _SUBLANE * (4 // min(itemsize, o_item))       # 8 (f32) / 16 (bf16)
    n_tiles = max(pl.cdiv(B, batch_tile), 1)
    if B > row_gran and n_tiles < 2:
        n_tiles = 2                    # >=2 grid steps so v7x's 2nd TC gets work
    TB = _round_up(pl.cdiv(B, n_tiles), row_gran)            # near-equal tiles
    # Fill 256-wide MXU M-passes (v6e/v7x) when it adds only a little padding.
    if TB > _MXU_M // 2:
        tb256 = _round_up(TB, _MXU_M)
        if pl.cdiv(B, tb256) * tb256 - B <= max(B // 16, _MXU_M // 8):
            TB = tb256
    n_tiles = pl.cdiv(B, TB)
    Bp = n_tiles * TB

    # ---- VMEM footprint models ---------------------------------------------
    def resident_bytes():
        return (2 * TB * Ip * itemsize            # x tile, double-buffered
                + 2 * TB * Op * o_item            # out tile, double-buffered
                + (Ip * Hp + Hp * Op) * itemsize  # weights, single-buffered
                + (Hp + Op) * 4                   # biases, single-buffered
                + TB * Hp * (4 + itemsize)        # z1/a1 temporaries
                + TB * Op * 4)                    # z2 temporary

    def htiled_bytes(th):
        return (2 * TB * Ip * itemsize
                + 2 * TB * Op * o_item
                + 2 * (Ip * th + th * Op) * itemsize   # w1/w2 tiles, double-buffered
                + 2 * th * 4 + Op * 4                  # b1 tiles + b2
                + TB * Op * 4                          # f32 accumulator scratch
                + TB * th * (4 + itemsize)             # z1/a1 temporaries
                + TB * Op * 4)                         # partial-product temporary

    def vmem_limit(need):
        return min(max(int(need * 1.3), 24 * 1024 * 1024), 120 * 1024 * 1024)

    x_p = _pad2d(x, Bp, Ip, cdt)

    # CostEstimate from the real (unpadded) dims — advisory for XLA scheduling.
    cost = pl.CostEstimate(
        flops=2 * B * (I_ * H + H * O),
        transcendentals=B * O,
        bytes_accessed=(B * I_ * itemsize + (I_ * H + H * O) * itemsize
                        + (H + O) * 4 + B * O * o_item),
    )

    use_htiled = (hidden_tile is not None) or (resident_bytes() > vmem_budget_bytes)

    if not use_htiled:
        # ---- fast path: weights fully VMEM-resident, 1-D grid over batch ----
        out_p = pl.pallas_call(
            _mlp_kernel_resident,
            out_shape=jax.ShapeDtypeStruct((Bp, Op), out_dtype),
            grid=(n_tiles,),
            in_specs=[
                # batch-tiled activations: auto double-buffered across grid steps
                pl.BlockSpec((TB, Ip), lambda i: (i, 0)),
                # weights/biases: constant index_map -> DMA'd once; single-buffered
                pl.BlockSpec((Ip, Hp), lambda i: (0, 0), pipeline_mode=pl.Buffered(1)),
                pl.BlockSpec((1, Hp), lambda i: (0, 0), pipeline_mode=pl.Buffered(1)),
                pl.BlockSpec((Hp, Op), lambda i: (0, 0), pipeline_mode=pl.Buffered(1)),
                pl.BlockSpec((1, Op), lambda i: (0, 0), pipeline_mode=pl.Buffered(1)),
            ],
            out_specs=pl.BlockSpec((TB, Op), lambda i: (i, 0)),
            compiler_params=pltpu.CompilerParams(
                dimension_semantics=("parallel",),
                vmem_limit_bytes=vmem_limit(resident_bytes()),
            ),
            cost_estimate=cost,
        )(x_p, w1_p, b1_p, w2_p, b2_p)
        return out_p[:B, :O]

    # ---- fallback path: hidden dim tiled (weights too big for the budget) ----
    if hidden_tile is not None:
        TH = min(max(_round_up(int(hidden_tile), _LANE), _LANE), Hp)
    else:
        TH = Hp
        while TH > _LANE and htiled_bytes(TH) > vmem_budget_bytes:
            TH = max(_round_up(TH // 2, _LANE), _LANE)
    Hpp = _round_up(Hp, TH)
    n_h = Hpp // TH
    if Hpp != Hp:   # extra zero-padding along H keeps the reduction exact
        w1_p = _pad2d(w1_p, Ip, Hpp, cdt)
        w2_p = _pad2d(w2_p, Hpp, Op, cdt)
        b1_p = _pad2d(b1_p, 1, Hpp, jnp.float32)

    out_p = pl.pallas_call(
        _mlp_kernel_htiled,
        out_shape=jax.ShapeDtypeStruct((Bp, Op), out_dtype),
        grid=(n_tiles, n_h),
        in_specs=[
            pl.BlockSpec((TB, Ip), lambda i, h: (i, 0)),
            pl.BlockSpec((Ip, TH), lambda i, h: (0, h)),
            pl.BlockSpec((1, TH), lambda i, h: (0, h)),
            pl.BlockSpec((TH, Op), lambda i, h: (h, 0)),
            pl.BlockSpec((1, Op), lambda i, h: (0, 0), pipeline_mode=pl.Buffered(1)),
        ],
        out_specs=pl.BlockSpec((TB, Op), lambda i, h: (i, 0)),
        scratch_shapes=[pltpu.VMEM((TB, Op), jnp.float32)],
        compiler_params=pltpu.CompilerParams(
            dimension_semantics=("parallel", "arbitrary"),
            vmem_limit_bytes=vmem_limit(htiled_bytes(TH)),
        ),
        cost_estimate=cost,
    )(x_p, w1_p, b1_p, w2_p, b2_p)
    return out_p[:B, :O]


def single_hidden_layer_network(x, w1, b1, w2, b2, *,
                                compute_dtype=jnp.bfloat16, **kwargs):
    """Forward pass from PyTorch-layout params (pads/transposes per call).

    For repeated calls, call prepare_params() once and mlp_forward() per step
    so the weight padding isn't re-materialized every forward.
    bf16 operands are the default (native MXU rate on v5e/v6e/v7x, f32
    accumulation + f32 epilogue); pass compute_dtype=jnp.float32 for exactness.
    """
    params = prepare_params(w1, b1, w2, b2, compute_dtype=compute_dtype)
    return mlp_forward(x, params, **kwargs)


def init_params(key, I, H, O):
    """Deterministic PyTorch-Linear-style init: U(-1/sqrt(fan_in), 1/sqrt(fan_in))."""
    k1, k2, k3, k4 = jax.random.split(key, 4)
    bound1 = 1.0 / jnp.sqrt(I)
    bound2 = 1.0 / jnp.sqrt(H)
    w1 = jax.random.uniform(k1, (H, I), jnp.float32, -bound1, bound1)
    b1 = jax.random.uniform(k2, (H,), jnp.float32, -bound1, bound1)
    w2 = jax.random.uniform(k3, (O, H), jnp.float32, -bound2, bound2)
    b2 = jax.random.uniform(k4, (O,), jnp.float32, -bound2, bound2)
    return w1, b1, w2, b2


if __name__ == "__main__":
    # Small shapes consistent with the module: batch=8, I=16, H=32, O=8.
    B, I, H, O = 8, 16, 32, 8

    key = jax.random.PRNGKey(0)
    kx, kp = jax.random.split(key)
    x = jax.random.normal(kx, (B, I), jnp.float32)
    w1, b1, w2, b2 = init_params(kp, I, H, O)

    # Pure-JAX reference (same math, outside Pallas).
    ref = jax.nn.sigmoid(jnp.maximum(x @ w1.T + b1, 0.0) @ w2.T + b2)

    # 1) f32 path (exact match), resident-weight fast path.
    out_f32 = jax.block_until_ready(
        single_hidden_layer_network(x, w1, b1, w2, b2,
                                    compute_dtype=jnp.float32))
    assert out_f32.shape == (B, O) and out_f32.dtype == jnp.float32
    assert jnp.allclose(out_f32, ref, atol=1e-5, rtol=1e-5)

    # 2) default bf16-operand path (f32 accumulation + f32 epilogue).
    out_bf16 = jax.block_until_ready(
        single_hidden_layer_network(x, w1, b1, w2, b2))
    assert out_bf16.shape == (B, O)
    assert jnp.allclose(out_bf16, ref, atol=3e-2, rtol=3e-2)

    # 3) H-tiled fallback path (forced): exercises the accumulator/when kernel.
    out_ht = jax.block_until_ready(
        single_hidden_layer_network(x, w1, b1, w2, b2,
                                    compute_dtype=jnp.float32,
                                    hidden_tile=128))
    assert out_ht.shape == (B, O)
    assert jnp.allclose(out_ht, ref, atol=1e-5, rtol=1e-5)

    # 4) bf16 output knob (halves the writeback stream when acceptable).
    out_bf16_out = jax.block_until_ready(
        single_hidden_layer_network(x, w1, b1, w2, b2,
                                    out_dtype=jnp.bfloat16))
    assert out_bf16_out.shape == (B, O) and out_bf16_out.dtype == jnp.bfloat16
    assert jnp.allclose(out_bf16_out.astype(jnp.float32), ref, atol=5e-2, rtol=5e-2)

    # Prepared-params path (weight padding hoisted out of the per-step call).
    params = prepare_params(w1, b1, w2, b2, compute_dtype=jnp.float32)
    out_prep = jax.block_until_ready(mlp_forward(x, params))
    assert jnp.allclose(out_prep, ref, atol=1e-5, rtol=1e-5)

    print("KERNEL_OK")
</pallas_src>

<mosaic_0001>
module attributes {stable_mosaic.version = 11 : i64} {
  func.func @_mlp_kernel_resident(%arg0: i32, %arg1: memref<8x128xf32, #tpu.memory_space<vmem>>, %arg2: memref<128x128xf32, #tpu.memory_space<vmem>>, %arg3: memref<1x128xf32, #tpu.memory_space<vmem>>, %arg4: memref<128x128xf32, #tpu.memory_space<vmem>>, %arg5: memref<1x128xf32, #tpu.memory_space<vmem>>, %arg6: memref<8x128xf32, #tpu.memory_space<vmem>>) attributes {dimension_semantics = [#tpu.dimension_semantics<parallel>], iteration_bounds = array<i64: 1>, scalar_prefetch = 0 : i64, scratch_operands = 0 : i64, tpu.core_type = #tpu.core_type<tc>, window_params = [{transform_indices = @transform_0, window_bounds = array<i64: 8, 128>}, {pipeline_mode = #tpu.pipeline_mode<synchronous>, transform_indices = @transform_1, window_bounds = array<i64: 128, 128>}, {pipeline_mode = #tpu.pipeline_mode<synchronous>, transform_indices = @transform_2, window_bounds = array<i64: 1, 128>}, {pipeline_mode = #tpu.pipeline_mode<synchronous>, transform_indices = @transform_3, window_bounds = array<i64: 128, 128>}, {pipeline_mode = #tpu.pipeline_mode<synchronous>, transform_indices = @transform_4, window_bounds = array<i64: 1, 128>}, {transform_indices = @transform_5, window_bounds = array<i64: 8, 128>}]} {
    %c0 = arith.constant 0 : index
    %c0_0 = arith.constant 0 : index
    %0 = vector.load %arg1[%c0, %c0_0] : memref<8x128xf32, #tpu.memory_space<vmem>>, vector<8x128xf32>
    %c0_1 = arith.constant 0 : index
    %c0_2 = arith.constant 0 : index
    %1 = vector.load %arg2[%c0_1, %c0_2] : memref<128x128xf32, #tpu.memory_space<vmem>>, vector<128x128xf32>
    %cst = arith.constant dense<0.000000e+00> : vector<8x128xf32>
    %2 = tpu.matmul %0, %1, %cst {dimension_numbers = #tpu.dot_dimension_numbers<[1], [0], [0], [1], [0, 0, 1, 1], [], []>} : vector<8x128xf32>, vector<128x128xf32>, vector<8x128xf32> -> vector<8x128xf32>
    %c0_3 = arith.constant 0 : index
    %c0_4 = arith.constant 0 : index
    %3 = vector.load %arg3[%c0_3, %c0_4] : memref<1x128xf32, #tpu.memory_space<vmem>>, vector<1x128xf32>
    %4 = vector.broadcast %3 : vector<1x128xf32> to vector<8x128xf32>
    %5 = arith.addf %2, %4 : vector<8x128xf32>
    %cst_5 = arith.constant 0.000000e+00 : f32
    %6 = vector.broadcast %cst_5 : f32 to vector<8x128xf32>
    %7 = arith.maximumf %5, %6 : vector<8x128xf32>
    %c0_6 = arith.constant 0 : index
    %c0_7 = arith.constant 0 : index
    %8 = vector.load %arg4[%c0_6, %c0_7] : memref<128x128xf32, #tpu.memory_space<vmem>>, vector<128x128xf32>
    %cst_8 = arith.constant dense<0.000000e+00> : vector<8x128xf32>
    %9 = tpu.matmul %7, %8, %cst_8 {dimension_numbers = #tpu.dot_dimension_numbers<[1], [0], [0], [1], [0, 0, 1, 1], [], []>} : vector<8x128xf32>, vector<128x128xf32>, vector<8x128xf32> -> vector<8x128xf32>
    %c0_9 = arith.constant 0 : index
    %c0_10 = arith.constant 0 : index
    %10 = vector.load %arg5[%c0_9, %c0_10] : memref<1x128xf32, #tpu.memory_space<vmem>>, vector<1x128xf32>
    %11 = vector.broadcast %10 : vector<1x128xf32> to vector<8x128xf32>
    %12 = arith.addf %9, %11 : vector<8x128xf32>
    %13 = arith.negf %12 : vector<8x128xf32>
    %14 = math.exp %13 : vector<8x128xf32>
    %cst_11 = arith.constant 1.000000e+00 : f32
    %15 = vector.broadcast %cst_11 : f32 to vector<8x128xf32>
    %16 = arith.addf %15, %14 : vector<8x128xf32>
    %17 = arith.divf %15, %16 : vector<8x128xf32>
    %c0_12 = arith.constant 0 : index
    %c0_13 = arith.constant 0 : index
    %18 = vector.load %arg6[%c0_12, %c0_13] : memref<8x128xf32, #tpu.memory_space<vmem>>, vector<8x128xf32>
    tpu.vector_store %arg6[%c0_12, %c0_13], %17 {strides = array<i32>} : memref<8x128xf32, #tpu.memory_space<vmem>>, vector<8x128xf32>,
    return
  }
  func.func @transform_0(%arg0: i32) -> (i32, i32) {
    %c0_i32 = arith.constant 0 : i32
    %c0_i32_0 = arith.constant 0 : i32
    return %arg0, %c0_i32 : i32, i32
  }
  func.func @transform_1(%arg0: i32) -> (i32, i32) {
    %c0_i32 = arith.constant 0 : i32
    %c0_i32_0 = arith.constant 0 : i32
    %c0_i32_1 = arith.constant 0 : i32
    return %c0_i32, %c0_i32_0 : i32, i32
  }
  func.func @transform_2(%arg0: i32) -> (i32, i32) {
    %c0_i32 = arith.constant 0 : i32
    %c0_i32_0 = arith.constant 0 : i32
    %c0_i32_1 = arith.constant 0 : i32
    return %c0_i32, %c0_i32_0 : i32, i32
  }
  func.func @transform_3(%arg0: i32) -> (i32, i32) {
    %c0_i32 = arith.constant 0 : i32
    %c0_i32_0 = arith.constant 0 : i32
    %c0_i32_1 = arith.constant 0 : i32
    return %c0_i32, %c0_i32_0 : i32, i32
  }
  func.func @transform_4(%arg0: i32) -> (i32, i32) {
    %c0_i32 = arith.constant 0 : i32
    %c0_i32_0 = arith.constant 0 : i32
    %c0_i32_1 = arith.constant 0 : i32
    return %c0_i32, %c0_i32_0 : i32, i32
  }
  func.func @transform_5(%arg0: i32) -> (i32, i32) {
    %c0_i32 = arith.constant 0 : i32
    %c0_i32_0 = arith.constant 0 : i32
    return %arg0, %c0_i32 : i32, i32
  }
}

</mosaic_0001>

<llo_original>
// kernel: tpu_custom_call.1
$region0: #{tpu_custom_call.1}
  #allocation0 [shape = 'u32[]', space=smem, size = 0x4, offset = 0x4, fixed_abs, tag = 'smem constant byte address 0x4 - core index']
  #allocation1 [shape = 'u32[72,128]{1,0:T(1,128)}', space=vmem, size = 0x9000, scoped, tag = 'internal scratch']
  %s0 = inlined_call_operand.hbm [shape: f32[8,128], index: 0, kind: input, shape index: {}]
  %s1 = inlined_call_operand.hbm [shape: f32[128,128], index: 1, kind: input, shape index: {}]
  %s2 = inlined_call_operand.vmem [shape: f32[1,128], index: 2, kind: input, shape index: {}]
  %s3 = inlined_call_operand.hbm [shape: f32[128,128], index: 3, kind: input, shape index: {}]
  %s4 = inlined_call_operand.vmem [shape: f32[1,128], index: 4, kind: input, shape index: {}]
  %s5 = inlined_call_operand.hbm [shape: f32[8,128], index: 5, kind: output, shape index: {}]
  %s6 = sld [smem:[#allocation0]]
  $region42: #{tpu_custom_call.1} parent=0
    _
  %s8 = ssub.s32 1, %s6
  %s9 = scalar_select 0, %s8, %s6
  $region1: #{tpu_custom_call.1} parent=0
    #allocation2 [shape = 'u8[4096]{0}', space=vmem, size = 0x1000, scoped, tag = 'input window, operand 0, single buffered']
    #allocation3 [shape = 's32[1]{0}', space=sflag, size = 0x4, scoped, tag = 'scoped memory for tpu_custom_call.1']
    #allocation4 [shape = 's32[1]{0}', space=sflag, size = 0x4, scoped, tag = 'scoped memory for tpu_custom_call.1']
    #allocation5 [shape = 'u8[65536]{0}', space=vmem, size = 0x10000, scoped, tag = 'input window, operand 1, single buffered']
    #allocation6 [shape = 's32[1]{0}', space=sflag, size = 0x4, scoped, tag = 'scoped memory for tpu_custom_call.1']
    #allocation7 [shape = 'u8[65536]{0}', space=vmem, size = 0x10000, scoped, tag = 'input window, operand 3, single buffered']
    #allocation8 [shape = 'u8[4096]{0}', space=vmem, size = 0x1000, scoped, tag = 'output window, operand 0, single buffered']
    %10 = vsyncpa [#allocation3], 0
    %11 = vsyncpa [#allocation6], 0
    %12 = vsyncpa [#allocation4], 0
    // Predicated region
    $region2: #{tpu_custom_call.1} parent=1 // pred_check
      _
    $region3: #{tpu_custom_call.1} parent=1 // pred_check_branch
      %14 = sbr.rel (0) target = $region5
    $region4: #{tpu_custom_call.1} parent=1 // pred_region
      %16 = vsyncadd [#allocation3], 0
      %s18 = sshll.u32 %s0, 4
      %s19 = int_to_ptr.hbm [resolvable:$true] %s18
      %s20 = sshll.u32 [#allocation2], 4
      %s21 = int_to_ptr.vmem [resolvable:$true] %s20
      %23 = dma.hbm_to_vmem [thread:$0]  %s19, 128, %s21, [#allocation3]
    $region5: #{tpu_custom_call.1} parent=1 // pred_fallthru
      _
    // Predicated region
    $region6: #{tpu_custom_call.1} parent=1 // pred_check
      _
    $region7: #{tpu_custom_call.1} parent=1 // pred_check_branch
      %25 = sbr.rel (0) target = $region9
    $region8: #{tpu_custom_call.1} parent=1 // pred_region
      %27 = vsyncadd [#allocation6], 0
      %s28 = sshll.u32 %s1, 4
      %s29 = int_to_ptr.hbm [resolvable:$true] %s28
      %s30 = sshll.u32 [#allocation5], 4
      %s31 = int_to_ptr.vmem [resolvable:$true] %s30
      %36 = dma.hbm_to_vmem [thread:$0]  %s29, 2048, %s31, [#allocation6], 128, 128, 8
    $region9: #{tpu_custom_call.1} parent=1 // pred_fallthru
      _
    // Predicated region
    $region10: #{tpu_custom_call.1} parent=1 // pred_check
      _
    $region11: #{tpu_custom_call.1} parent=1 // pred_check_branch
      %38 = sbr.rel (0) target = $region13
    $region12: #{tpu_custom_call.1} parent=1 // pred_region
      _
    $region13: #{tpu_custom_call.1} parent=1 // pred_fallthru
      _
    // Predicated region
    $region14: #{tpu_custom_call.1} parent=1 // pred_check
      _
    $region15: #{tpu_custom_call.1} parent=1 // pred_check_branch
      %40 = sbr.rel (0) target = $region17
    $region16: #{tpu_custom_call.1} parent=1 // pred_region
      %42 = vsyncadd [#allocation6], 0
      %s43 = sshll.u32 %s3, 4
      %s44 = int_to_ptr.hbm [resolvable:$true] %s43
      %s45 = sshll.u32 [#allocation7], 4
      %s46 = int_to_ptr.vmem [resolvable:$true] %s45
      %51 = dma.hbm_to_vmem [thread:$0]  %s44, 2048, %s46, [#allocation6], 128, 128, 8
    $region17: #{tpu_custom_call.1} parent=1 // pred_fallthru
      _
    // Predicated region
    $region18: #{tpu_custom_call.1} parent=1 // pred_check
      _
    $region19: #{tpu_custom_call.1} parent=1 // pred_check_branch
      %53 = sbr.rel (0) target = $region21
    $region20: #{tpu_custom_call.1} parent=1 // pred_region
      _
    $region21: #{tpu_custom_call.1} parent=1 // pred_fallthru
      _
    // Predicated region
    $region22: #{tpu_custom_call.1} parent=1 // pred_check
      _
    $region23: #{tpu_custom_call.1} parent=1 // pred_check_branch
      %55 = sbr.rel (0) target = $region25
    $region24: #{tpu_custom_call.1} parent=1 // pred_region
      %57 = dma.done [#allocation3], 128
    $region25: #{tpu_custom_call.1} parent=1 // pred_fallthru
      _
    // Predicated region
    $region26: #{tpu_custom_call.1} parent=1 // pred_check
      _
    $region27: #{tpu_custom_call.1} parent=1 // pred_check_branch
      %59 = sbr.rel (0) target = $region29
    $region28: #{tpu_custom_call.1} parent=1 // pred_region
      %61 = dma.done [#allocation6], 2048
    $region29: #{tpu_custom_call.1} parent=1 // pred_fallthru
      _
    // Predicated region
    $region30: #{tpu_custom_call.1} parent=1 // pred_check
      _
    $region31: #{tpu_custom_call.1} parent=1 // pred_check_branch
      %63 = sbr.rel (0) target = $region33
    $region32: #{tpu_custom_call.1} parent=1 // pred_region
      %65 = dma.done [#allocation6], 2048
    $region33: #{tpu_custom_call.1} parent=1 // pred_fallthru
      _
    %v66 = vld [vmem:[#allocation2] sm:$0xff]
    %v67 = vld [vmem:[#allocation5] sm:$0xff]
    %v68 = vld [vmem:[#allocation5 + $0x8] sm:$0xff]
    %v69 = vld [vmem:[#allocation5 + $0x10] sm:$0xff]
    %v70 = vld [vmem:[#allocation5 + $0x18] sm:$0xff]
    %v71 = vld [vmem:[#allocation5 + $0x20] sm:$0xff]
    %v72 = vld [vmem:[#allocation5 + $0x28] sm:$0xff]
    %v73 = vld [vmem:[#allocation5 + $0x30] sm:$0xff]
    %v74 = vld [vmem:[#allocation5 + $0x38] sm:$0xff]
    %v75 = vld [vmem:[#allocation5 + $0x40] sm:$0xff]
    %v76 = vld [vmem:[#allocation5 + $0x48] sm:$0xff]
    %v77 = vld [vmem:[#allocation5 + $0x50] sm:$0xff]
    %v78 = vld [vmem:[#allocation5 + $0x58] sm:$0xff]
    %v79 = vld [vmem:[#allocation5 + $0x60] sm:$0xff]
    %v80 = vld [vmem:[#allocation5 + $0x68] sm:$0xff]
    %v81 = vld [vmem:[#allocation5 + $0x70] sm:$0xff]
    %v82 = vld [vmem:[#allocation5 + $0x78] sm:$0xff]
    %v83 = vld [vmem:[%s2] sm:$0x1]
    %v85 = vperm.slane %v83, 0
    %87 = vmatpush.msra.mxu0 %v82
    %88 = vmatpush.msra.mxu0 %v81
    %89 = vmatpush.msra.mxu0 %v80
    %90 = vmatpush.msra.mxu0 %v79
    %91 = vmatpush.msra.mxu0 %v78
    %92 = vmatpush.msra.mxu0 %v77
    %93 = vmatpush.msra.mxu0 %v76
    %94 = vmatpush.msra.mxu0 %v75
    %95 = vmatpush.msra.mxu0 %v74
    %96 = vmatpush.msra.mxu0 %v73
    %97 = vmatpush.msra.mxu0 %v72
    %98 = vmatpush.msra.mxu0 %v71
    %99 = vmatpush.msra.mxu0 %v70
    %100 = vmatpush.msra.mxu0 %v69
    %101 = vmatpush.msra.mxu0 %v68
    %102 = vmatpush.msra.mxu0 %v67
    %103 = vmatmul.f32.gmra.mxu0 %v66
    %v104 = vpop.f32.mrf.mxu0
    %v105 = vadd.f32 %v85, %v104
    %106 = vdwg.mxu0
    %v107 = vmax.f32 %v105, 0.0
    %v108 = vld [vmem:[#allocation7] sm:$0xff]
    %v109 = vld [vmem:[#allocation7 + $0x8] sm:$0xff]
    %v110 = vld [vmem:[#allocation7 + $0x10] sm:$0xff]
    %v111 = vld [vmem:[#allocation7 + $0x18] sm:$0xff]
    %v112 = vld [vmem:[#allocation7 + $0x20] sm:$0xff]
    %v113 = vld [vmem:[#allocation7 + $0x28] sm:$0xff]
    %v114 = vld [vmem:[#allocation7 + $0x30] sm:$0xff]
    %v115 = vld [vmem:[#allocation7 + $0x38] sm:$0xff]
    %v116 = vld [vmem:[#allocation7 + $0x40] sm:$0xff]
    %v117 = vld [vmem:[#allocation7 + $0x48] sm:$0xff]
    %v118 = vld [vmem:[#allocation7 + $0x50] sm:$0xff]
    %v119 = vld [vmem:[#allocation7 + $0x58] sm:$0xff]
    %v120 = vld [vmem:[#allocation7 + $0x60] sm:$0xff]
    %v121 = vld [vmem:[#allocation7 + $0x68] sm:$0xff]
    %v122 = vld [vmem:[#allocation7 + $0x70] sm:$0xff]
    %v123 = vld [vmem:[#allocation7 + $0x78] sm:$0xff]
    %v124 = vld [vmem:[%s4] sm:$0x1]
    %v126 = vperm.slane %v124, 0
    %128 = vmatpush.msra.mxu0 %v123
    %129 = vmatpush.msra.mxu0 %v122
    %130 = vmatpush.msra.mxu0 %v121
    %131 = vmatpush.msra.mxu0 %v120
    %132 = vmatpush.msra.mxu0 %v119
    %133 = vmatpush.msra.mxu0 %v118
    %134 = vmatpush.msra.mxu0 %v117
    %135 = vmatpush.msra.mxu0 %v116
    %136 = vmatpush.msra.mxu0 %v115
    %137 = vmatpush.msra.mxu0 %v114
    %138 = vmatpush.msra.mxu0 %v113
    %139 = vmatpush.msra.mxu0 %v112
    %140 = vmatpush.msra.mxu0 %v111
    %141 = vmatpush.msra.mxu0 %v110
    %142 = vmatpush.msra.mxu0 %v109
    %143 = vmatpush.msra.mxu0 %v108
    %144 = vmatmul.f32.gmra.mxu0 %v107
    %v145 = vpop.f32.mrf.mxu0
    %v146 = vadd.f32 %v126, %v145
    %147 = vdwg.mxu0
    %v148 = vxor.u32 %v146, 2147483648
    %v149 = vmul.f32 %v148, 1.442695
    %v150 = vpow.pop %v149
    %v151 = vadd.f32 %v150, 1.0
    %v152 = vrcp.pop %v151
    %v153 = vmul.f32 %v151, %v152
    %v154 = vsub.f32 1.0, %v153
    %v155 = vmul.f32 %v152, %v154
    %v156 = vadd.f32 %v152, %v155
    %vm157 = vweird.f32 %v151
    %vm158 = vweird.f32 %v152
    %vm159 = vmor %vm157, %vm158
    %v160 = vsel %vm159, %v152, %v156
    %v161 = vand.u32 2147483647, %v151
    %vm162 = vcmp.eq.f32.partialorder %v161, 8.507059e+37
    %v163 = vand.u32 %v151, 2147483648
    %v164 = vor.u32 1.1754944e-38, %v163
    %v165 = vsel %vm162, %v164, %v160
    %v166 = vmul.f32 1.0, %v165
    %167 = vst [vmem:[#allocation8] sm:$0xff] %v166
    // Predicated region
    $region34: #{tpu_custom_call.1} parent=1 // pred_check
      _
    $region35: #{tpu_custom_call.1} parent=1 // pred_check_branch
      %169 = sbr.rel (0) target = $region37
    $region36: #{tpu_custom_call.1} parent=1 // pred_region
      %171 = vsyncadd [#allocation4], 0
      %s173 = sshll.u32 [#allocation8], 4
      %s174 = int_to_ptr.vmem [resolvable:$true] %s173
      %s175 = sshll.u32 %s5, 4
      %s176 = int_to_ptr.hbm [resolvable:$true] %s175
      %178 = dma.vmem_to_hbm [thread:$0]  %s174, 128, %s176, [#allocation4]
    $region37: #{tpu_custom_call.1} parent=1 // pred_fallthru
      _
    // Predicated region
    $region38: #{tpu_custom_call.1} parent=1 // pred_check
      _
    $region39: #{tpu_custom_call.1} parent=1 // pred_check_branch
      %180 = sbr.rel (0) target = $region41
    $region40: #{tpu_custom_call.1} parent=1 // pred_region
      %182 = dma.done [#allocation4], 128
    $region41: #{tpu_custom_call.1} parent=1 // pred_fallthru
      _
    %183 = vsyncpa [#allocation3], 1
    %184 = vsyncpa [#allocation6], 1
    %185 = vsyncpa [#allocation4], 1

</llo_original>
